<compile_context>
chip_gen: v5e
topology: v5e:2x2
jax: 0.10.0
libtpu: 0.0.40
codegen_flags: <defaults>
</compile_context>

<pallas_src>
import functools

import jax
import jax.numpy as jnp
from jax.experimental import pallas as pl
from jax.experimental.pallas import tpu as pltpu


HIDDEN_PAD = 128   # hidden width 100 -> 128 (lane-dense for the MXU)
OUT_SUB = 8        # output rows 3 -> 8 sublanes (transposed output slab)


def _round_up(n, m):
    return ((n + m - 1) // m) * m


def _pad_to(a, shape):
    pads = [(0, t - s) for s, t in zip(a.shape, shape)]
    return jnp.pad(a, pads)


def _nbytes(a):
    return a.size * a.dtype.itemsize


def mlp_kernel(xT_ref, w1T_ref, b1T_ref, w2T_ref, b2T_ref, w3T_ref, b3T_ref,
               oT_ref, *, approx_sigmoid, act_dtype):
    def sigmoid(h):
        h = h.astype(act_dtype)
        p = jnp.exp(-h)                                   # EUP
        one = jnp.asarray(1.0, act_dtype)
        if approx_sigmoid:
            y = pl.reciprocal(one + p, approx=True)       # EUP vrcp (approx)
        else:
            y = one / (one + p)                           # exact divide
        return y.astype(jnp.float32)

    xT = xT_ref[...]                                      # (2, TB)   f32
    w1T = w1T_ref[...]                                    # (128, 2)  f32

    # fc1 (K = 2) on the VPU: (128, 1) weight columns (hoistable, constant
    # across the tile) times sublane-broadcast x rows.  No MXU pass for a
    # 2-deep contraction.
    h1 = (w1T[:, 0:1] * xT[0:1, :]
          + w1T[:, 1:2] * xT[1:2, :]
          + b1T_ref[...])                                 # (128, TB) f32
    h1 = sigmoid(h1)

    # fc2 / fc3 on the MXU (transposed: h^T = W^T @ h_prev^T), f32 accumulate.
    h2 = jnp.dot(w2T_ref[...], h1,
                 preferred_element_type=jnp.float32) + b2T_ref[...]
    h2 = sigmoid(h2)

    out = jnp.dot(w3T_ref[...], h2,
                  preferred_element_type=jnp.float32) + b3T_ref[...]

    oT_ref[...] = out.astype(oT_ref.dtype)                # (8, TB) lane-dense


def prepare_params(params):
    """Pad + transpose parameters once (hoisted out of the per-call path).

    Padded rows/cols are exactly zero so the padded hidden lanes
    (sigmoid(0) = 0.5) contribute nothing downstream.
    """
    w1, b1, w2, b2, w3, b3 = params
    in_dim = w1.shape[0]
    out_dim = w3.shape[1]

    w1T = _pad_to(w1.T.astype(jnp.float32), (HIDDEN_PAD, in_dim))      # (128, 2)
    b1T = _pad_to(b1.reshape(-1, 1).astype(jnp.float32), (HIDDEN_PAD, 1))
    w2T = _pad_to(w2.T.astype(jnp.float32), (HIDDEN_PAD, HIDDEN_PAD))  # (128, 128)
    b2T = _pad_to(b2.reshape(-1, 1).astype(jnp.float32), (HIDDEN_PAD, 1))
    w3T = _pad_to(w3.T.astype(jnp.float32), (OUT_SUB, HIDDEN_PAD))     # (8, 128)
    b3T = _pad_to(b3.reshape(-1, 1).astype(jnp.float32), (OUT_SUB, 1))

    return {
        "weights": (w1T, b1T, w2T, b2T, w3T, b3T),
        "in_dim": in_dim,
        "out_dim": out_dim,
    }


def mlp_forward(x, prepared, *, block_b=2048, approx_sigmoid=True,
                act_dtype=jnp.float32):
    """Fused MLP forward.  x: (B, 2) f32.  Returns (B, 3) f32.

    block_b: batch tile (lanes per grid step); rounded to a multiple of 128.
    act_dtype: EUP dtype for the sigmoids (bf16 is faster on v6e/v7x; keep
               f32 on v5e, which has no bf16 EUP).
    """
    w1T, b1T, w2T, b2T, w3T, b3T = prepared["weights"]
    in_dim = prepared["in_dim"]
    out_dim = prepared["out_dim"]
    B = x.shape[0]

    # Batch tile: multiple of 128 lanes.  At the default TB=2048 the
    # double-buffered x/out tiles + resident weights + activation scratch are
    # ~3 MiB, well under every generation's scoped-VMEM default.
    TB = max(128, min(_round_up(block_b, 128), _round_up(B, 128)))
    Bp = _round_up(B, TB)
    grid = (Bp // TB,)

    xT = _pad_to(x.astype(jnp.float32).T, (in_dim, Bp))   # (2, Bp), one copy

    const_spec = lambda a: pl.BlockSpec(a.shape, lambda i: (0, 0))

    flops = 2 * Bp * (in_dim * HIDDEN_PAD
                      + HIDDEN_PAD * HIDDEN_PAD
                      + HIDDEN_PAD * OUT_SUB)
    transcendentals = 2 * Bp * HIDDEN_PAD
    bytes_accessed = (_nbytes(xT)
                      + sum(_nbytes(a) for a in prepared["weights"])
                      + Bp * OUT_SUB * 4)

    kernel = functools.partial(mlp_kernel,
                               approx_sigmoid=approx_sigmoid,
                               act_dtype=act_dtype)

    outT = pl.pallas_call(
        kernel,
        out_shape=jax.ShapeDtypeStruct((OUT_SUB, Bp), jnp.float32),
        grid=grid,
        in_specs=[
            pl.BlockSpec((in_dim, TB), lambda i: (0, i)),  # x columns tiled
            const_spec(w1T), const_spec(b1T),              # weights resident
            const_spec(w2T), const_spec(b2T),
            const_spec(w3T), const_spec(b3T),
        ],
        out_specs=pl.BlockSpec((OUT_SUB, TB), lambda i: (0, i)),
        compiler_params=pltpu.CompilerParams(
            dimension_semantics=("parallel",),             # megacore on v7x
        ),
        cost_estimate=pl.CostEstimate(
            flops=flops,
            transcendentals=transcendentals,
            bytes_accessed=bytes_accessed,
        ),
    )(xT, w1T, b1T, w2T, b2T, w3T, b3T)

    # Only the (out_dim, B) corner is real; tiny slice + transpose back.
    return outT[:out_dim, :B].T


def init_params(key):
    """Deterministic init mirroring PyTorch nn.Linear shapes.

    fc1: Linear(2, 100), fc2: Linear(100, 100), fc3: Linear(100, 3).
    Weights are stored as (in_features, out_features); biases as (1, out).
    """
    def linear(key, fan_in, fan_out):
        kw, kb = jax.random.split(key)
        bound = 1.0 / jnp.sqrt(fan_in)
        w = jax.random.uniform(kw, (fan_in, fan_out), jnp.float32, -bound, bound)
        b = jax.random.uniform(kb, (1, fan_out), jnp.float32, -bound, bound)
        return w, b

    k1, k2, k3 = jax.random.split(key, 3)
    w1, b1 = linear(k1, 2, 100)
    w2, b2 = linear(k2, 100, 100)
    w3, b3 = linear(k3, 100, 3)
    return (w1, b1, w2, b2, w3, b3)


def mlp_reference(x, params):
    w1, b1, w2, b2, w3, b3 = params
    h1 = jax.nn.sigmoid(x @ w1 + b1)
    h2 = jax.nn.sigmoid(h1 @ w2 + b2)
    return h2 @ w3 + b3


if __name__ == "__main__":
    key = jax.random.PRNGKey(0)
    k_params, k_x, k_x2 = jax.random.split(key, 3)

    params = init_params(k_params)
    prepared = prepare_params(params)   # pad/transpose once, reuse per call

    # Small batch (module's expected input: (B, 2) features).
    x = jax.random.normal(k_x, (8, 2), jnp.float32)
    ref = mlp_reference(x, params)

    # Exact path (f32 MXU, exact divide in the sigmoid): tight tolerance.
    out_exact = jax.block_until_ready(
        mlp_forward(x, prepared, approx_sigmoid=False))
    assert out_exact.shape == (8, 3), out_exact.shape
    assert jnp.allclose(out_exact, ref, atol=1e-5, rtol=1e-5), "exact mismatch"

    # Fast path (EUP approx reciprocal for the sigmoid): looser tolerance.
    out_fast = jax.block_until_ready(mlp_forward(x, prepared))
    assert out_fast.shape == (8, 3), out_fast.shape
    assert jnp.allclose(out_fast, ref, atol=5e-2, rtol=5e-2), "approx mismatch"

    # Larger, non-multiple-of-tile batch with a small block_b so the batch
    # grid actually iterates (exercises tiling, padding, and the slice-back).
    x_big = jax.random.normal(k_x2, (777, 2), jnp.float32)
    ref_big = mlp_reference(x_big, params)
    out_big = jax.block_until_ready(
        mlp_forward(x_big, prepared, block_b=256, approx_sigmoid=False))
    assert out_big.shape == (777, 3), out_big.shape
    assert jnp.allclose(out_big, ref_big, atol=1e-5, rtol=1e-5), "big-batch mismatch"

    print("KERNEL_OK")
</pallas_src>

<mosaic_0001>
module attributes {stable_mosaic.version = 11 : i64} {
  func.func @mlp_kernel(%arg0: i32, %arg1: memref<2x128xf32, #tpu.memory_space<vmem>>, %arg2: memref<128x2xf32, #tpu.memory_space<vmem>>, %arg3: memref<128x1xf32, #tpu.memory_space<vmem>>, %arg4: memref<128x128xf32, #tpu.memory_space<vmem>>, %arg5: memref<128x1xf32, #tpu.memory_space<vmem>>, %arg6: memref<8x128xf32, #tpu.memory_space<vmem>>, %arg7: memref<8x1xf32, #tpu.memory_space<vmem>>, %arg8: memref<8x128xf32, #tpu.memory_space<vmem>>) attributes {dimension_semantics = [#tpu.dimension_semantics<parallel>], iteration_bounds = array<i64: 1>, scalar_prefetch = 0 : i64, scratch_operands = 0 : i64, tpu.core_type = #tpu.core_type<tc>, window_params = [{transform_indices = @transform_0, window_bounds = array<i64: 2, 128>}, {pipeline_mode = #tpu.pipeline_mode<synchronous>, transform_indices = @transform_1, window_bounds = array<i64: 128, 2>}, {pipeline_mode = #tpu.pipeline_mode<synchronous>, transform_indices = @transform_2, window_bounds = array<i64: 128, 1>}, {pipeline_mode = #tpu.pipeline_mode<synchronous>, transform_indices = @transform_3, window_bounds = array<i64: 128, 128>}, {pipeline_mode = #tpu.pipeline_mode<synchronous>, transform_indices = @transform_4, window_bounds = array<i64: 128, 1>}, {pipeline_mode = #tpu.pipeline_mode<synchronous>, transform_indices = @transform_5, window_bounds = array<i64: 8, 128>}, {pipeline_mode = #tpu.pipeline_mode<synchronous>, transform_indices = @transform_6, window_bounds = array<i64: 8, 1>}, {transform_indices = @transform_7, window_bounds = array<i64: 8, 128>}]} {
    %c0 = arith.constant 0 : index
    %c0_0 = arith.constant 0 : index
    %0 = vector.load %arg1[%c0, %c0_0] : memref<2x128xf32, #tpu.memory_space<vmem>>, vector<2x128xf32>
    %c0_1 = arith.constant 0 : index
    %c0_2 = arith.constant 0 : index
    %1 = vector.load %arg2[%c0_1, %c0_2] : memref<128x2xf32, #tpu.memory_space<vmem>>, vector<128x2xf32>
    %2 = vector.extract_strided_slice %1 {offsets = [0, 0], sizes = [128, 1], strides = [1, 1]} : vector<128x2xf32> to vector<128x1xf32>
    %3 = vector.extract_strided_slice %0 {offsets = [0, 0], sizes = [1, 128], strides = [1, 1]} : vector<2x128xf32> to vector<1x128xf32>
    %4 = vector.broadcast %2 : vector<128x1xf32> to vector<128x128xf32>
    %5 = vector.broadcast %3 : vector<1x128xf32> to vector<128x128xf32>
    %6 = arith.mulf %4, %5 : vector<128x128xf32>
    %7 = vector.extract_strided_slice %1 {offsets = [0, 1], sizes = [128, 1], strides = [1, 1]} : vector<128x2xf32> to vector<128x1xf32>
    %8 = vector.extract_strided_slice %0 {offsets = [1, 0], sizes = [1, 128], strides = [1, 1]} : vector<2x128xf32> to vector<1x128xf32>
    %9 = vector.broadcast %7 : vector<128x1xf32> to vector<128x128xf32>
    %10 = vector.broadcast %8 : vector<1x128xf32> to vector<128x128xf32>
    %11 = arith.mulf %9, %10 : vector<128x128xf32>
    %12 = arith.addf %6, %11 : vector<128x128xf32>
    %c0_3 = arith.constant 0 : index
    %c0_4 = arith.constant 0 : index
    %13 = vector.load %arg3[%c0_3, %c0_4] : memref<128x1xf32, #tpu.memory_space<vmem>>, vector<128x1xf32>
    %14 = vector.broadcast %13 : vector<128x1xf32> to vector<128x128xf32>
    %15 = arith.addf %12, %14 : vector<128x128xf32>
    %cst = arith.constant 0.000000e+00 : f32
    %16 = vector.broadcast %cst : f32 to vector<128x128xf32>
    %17 = arith.subf %16, %15 : vector<128x128xf32>
    %18 = math.exp %17 : vector<128x128xf32>
    %cst_5 = arith.constant 1.000000e+00 : f32
    %19 = vector.broadcast %cst_5 : f32 to vector<128x128xf32>
    %20 = arith.addf %19, %18 : vector<128x128xf32>
    %cst_6 = arith.constant 1.000000e+00 : f32
    %21 = vector.broadcast %cst_6 : f32 to vector<128x128xf32>
    %22 = arith.divf %21, %20 : vector<128x128xf32>
    %c0_7 = arith.constant 0 : index
    %c0_8 = arith.constant 0 : index
    %23 = vector.load %arg4[%c0_7, %c0_8] : memref<128x128xf32, #tpu.memory_space<vmem>>, vector<128x128xf32>
    %cst_9 = arith.constant dense<0.000000e+00> : vector<128x128xf32>
    %24 = tpu.matmul %23, %22, %cst_9 {dimension_numbers = #tpu.dot_dimension_numbers<[1], [0], [0], [1], [0, 0, 1, 1], [], []>} : vector<128x128xf32>, vector<128x128xf32>, vector<128x128xf32> -> vector<128x128xf32>
    %c0_10 = arith.constant 0 : index
    %c0_11 = arith.constant 0 : index
    %25 = vector.load %arg5[%c0_10, %c0_11] : memref<128x1xf32, #tpu.memory_space<vmem>>, vector<128x1xf32>
    %26 = vector.broadcast %25 : vector<128x1xf32> to vector<128x128xf32>
    %27 = arith.addf %24, %26 : vector<128x128xf32>
    %cst_12 = arith.constant 0.000000e+00 : f32
    %28 = vector.broadcast %cst_12 : f32 to vector<128x128xf32>
    %29 = arith.subf %28, %27 : vector<128x128xf32>
    %30 = math.exp %29 : vector<128x128xf32>
    %cst_13 = arith.constant 1.000000e+00 : f32
    %31 = vector.broadcast %cst_13 : f32 to vector<128x128xf32>
    %32 = arith.addf %31, %30 : vector<128x128xf32>
    %cst_14 = arith.constant 1.000000e+00 : f32
    %33 = vector.broadcast %cst_14 : f32 to vector<128x128xf32>
    %34 = arith.divf %33, %32 : vector<128x128xf32>
    %c0_15 = arith.constant 0 : index
    %c0_16 = arith.constant 0 : index
    %35 = vector.load %arg6[%c0_15, %c0_16] : memref<8x128xf32, #tpu.memory_space<vmem>>, vector<8x128xf32>
    %cst_17 = arith.constant dense<0.000000e+00> : vector<8x128xf32>
    %36 = tpu.matmul %35, %34, %cst_17 {dimension_numbers = #tpu.dot_dimension_numbers<[1], [0], [0], [1], [0, 0, 1, 1], [], []>} : vector<8x128xf32>, vector<128x128xf32>, vector<8x128xf32> -> vector<8x128xf32>
    %c0_18 = arith.constant 0 : index
    %c0_19 = arith.constant 0 : index
    %37 = vector.load %arg7[%c0_18, %c0_19] : memref<8x1xf32, #tpu.memory_space<vmem>>, vector<8x1xf32>
    %38 = vector.broadcast %37 : vector<8x1xf32> to vector<8x128xf32>
    %39 = arith.addf %36, %38 : vector<8x128xf32>
    %c0_20 = arith.constant 0 : index
    %c0_21 = arith.constant 0 : index
    %40 = vector.load %arg8[%c0_20, %c0_21] : memref<8x128xf32, #tpu.memory_space<vmem>>, vector<8x128xf32>
    tpu.vector_store %arg8[%c0_20, %c0_21], %39 {strides = array<i32>} : memref<8x128xf32, #tpu.memory_space<vmem>>, vector<8x128xf32>,
    return
  }
  func.func @transform_0(%arg0: i32) -> (i32, i32) {
    %c0_i32 = arith.constant 0 : i32
    %c0_i32_0 = arith.constant 0 : i32
    return %c0_i32, %arg0 : i32, i32
  }
  func.func @transform_1(%arg0: i32) -> (i32, i32) {
    %c0_i32 = arith.constant 0 : i32
    %c0_i32_0 = arith.constant 0 : i32
    %c0_i32_1 = arith.constant 0 : i32
    return %c0_i32, %c0_i32_0 : i32, i32
  }
  func.func @transform_2(%arg0: i32) -> (i32, i32) {
    %c0_i32 = arith.constant 0 : i32
    %c0_i32_0 = arith.constant 0 : i32
    %c0_i32_1 = arith.constant 0 : i32
    return %c0_i32, %c0_i32_0 : i32, i32
  }
  func.func @transform_3(%arg0: i32) -> (i32, i32) {
    %c0_i32 = arith.constant 0 : i32
    %c0_i32_0 = arith.constant 0 : i32
    %c0_i32_1 = arith.constant 0 : i32
    return %c0_i32, %c0_i32_0 : i32, i32
  }
  func.func @transform_4(%arg0: i32) -> (i32, i32) {
    %c0_i32 = arith.constant 0 : i32
    %c0_i32_0 = arith.constant 0 : i32
    %c0_i32_1 = arith.constant 0 : i32
    return %c0_i32, %c0_i32_0 : i32, i32
  }
  func.func @transform_5(%arg0: i32) -> (i32, i32) {
    %c0_i32 = arith.constant 0 : i32
    %c0_i32_0 = arith.constant 0 : i32
    %c0_i32_1 = arith.constant 0 : i32
    return %c0_i32, %c0_i32_0 : i32, i32
  }
  func.func @transform_6(%arg0: i32) -> (i32, i32) {
    %c0_i32 = arith.constant 0 : i32
    %c0_i32_0 = arith.constant 0 : i32
    %c0_i32_1 = arith.constant 0 : i32
    return %c0_i32, %c0_i32_0 : i32, i32
  }
  func.func @transform_7(%arg0: i32) -> (i32, i32) {
    %c0_i32 = arith.constant 0 : i32
    %c0_i32_0 = arith.constant 0 : i32
    return %c0_i32, %arg0 : i32, i32
  }
}

</mosaic_0001>

<llo_original>
// kernel: tpu_custom_call.1
$region0: #{tpu_custom_call.1}
  #allocation0 [shape = 'u32[]', space=smem, size = 0x4, offset = 0x4, fixed_abs, tag = 'smem constant byte address 0x4 - core index']
  #allocation1 [shape = 'u32[72,128]{1,0:T(1,128)}', space=vmem, size = 0x9000, scoped, tag = 'internal scratch']
  %s0 = inlined_call_operand.vmem [shape: f32[2,128], index: 0, kind: input, shape index: {}]
  %s1 = inlined_call_operand.vmem [shape: f32[128,2], index: 1, kind: input, shape index: {}]
  %s2 = inlined_call_operand.vmem [shape: f32[128,1], index: 2, kind: input, shape index: {}]
  %s3 = inlined_call_operand.vmem [shape: f32[128,128], index: 3, kind: input, shape index: {}]
  %s4 = inlined_call_operand.vmem [shape: f32[128,1], index: 4, kind: input, shape index: {}]
  %s5 = inlined_call_operand.vmem [shape: f32[8,128], index: 5, kind: input, shape index: {}]
  %s6 = inlined_call_operand.vmem [shape: f32[8,1], index: 6, kind: input, shape index: {}]
  %s7 = inlined_call_operand.hbm [shape: f32[8,128], index: 7, kind: output, shape index: {}]
  %s8 = sld [smem:[#allocation0]]
  $region38: #{tpu_custom_call.1} parent=0
    _
  %s10 = ssub.s32 1, %s8
  %s11 = scalar_select 0, %s10, %s8
  $region1: #{tpu_custom_call.1} parent=0
    #allocation2 [shape = 'u8[4096]{0}', space=vmem, size = 0x1000, scoped, tag = 'output window, operand 0, single buffered']
    #allocation3 [shape = 's32[1]{0}', space=sflag, size = 0x4, scoped, tag = 'scoped memory for tpu_custom_call.1']
    %12 = vsyncpa [#allocation3], 0
    // Predicated region
    $region2: #{tpu_custom_call.1} parent=1 // pred_check
      _
    $region3: #{tpu_custom_call.1} parent=1 // pred_check_branch
      %14 = sbr.rel (0) target = $region5
    $region4: #{tpu_custom_call.1} parent=1 // pred_region
      _
    $region5: #{tpu_custom_call.1} parent=1 // pred_fallthru
      _
    // Predicated region
    $region6: #{tpu_custom_call.1} parent=1 // pred_check
      _
    $region7: #{tpu_custom_call.1} parent=1 // pred_check_branch
      %16 = sbr.rel (0) target = $region9
    $region8: #{tpu_custom_call.1} parent=1 // pred_region
      _
    $region9: #{tpu_custom_call.1} parent=1 // pred_fallthru
      _
    // Predicated region
    $region10: #{tpu_custom_call.1} parent=1 // pred_check
      _
    $region11: #{tpu_custom_call.1} parent=1 // pred_check_branch
      %18 = sbr.rel (0) target = $region13
    $region12: #{tpu_custom_call.1} parent=1 // pred_region
      _
    $region13: #{tpu_custom_call.1} parent=1 // pred_fallthru
      _
    // Predicated region
    $region14: #{tpu_custom_call.1} parent=1 // pred_check
      _
    $region15: #{tpu_custom_call.1} parent=1 // pred_check_branch
      %20 = sbr.rel (0) target = $region17
    $region16: #{tpu_custom_call.1} parent=1 // pred_region
      _
    $region17: #{tpu_custom_call.1} parent=1 // pred_fallthru
      _
    // Predicated region
    $region18: #{tpu_custom_call.1} parent=1 // pred_check
      _
    $region19: #{tpu_custom_call.1} parent=1 // pred_check_branch
      %22 = sbr.rel (0) target = $region21
    $region20: #{tpu_custom_call.1} parent=1 // pred_region
      _
    $region21: #{tpu_custom_call.1} parent=1 // pred_fallthru
      _
    // Predicated region
    $region22: #{tpu_custom_call.1} parent=1 // pred_check
      _
    $region23: #{tpu_custom_call.1} parent=1 // pred_check_branch
      %24 = sbr.rel (0) target = $region25
    $region24: #{tpu_custom_call.1} parent=1 // pred_region
      _
    $region25: #{tpu_custom_call.1} parent=1 // pred_fallthru
      _
    // Predicated region
    $region26: #{tpu_custom_call.1} parent=1 // pred_check
      _
    $region27: #{tpu_custom_call.1} parent=1 // pred_check_branch
      %26 = sbr.rel (0) target = $region29
    $region28: #{tpu_custom_call.1} parent=1 // pred_region
      _
    $region29: #{tpu_custom_call.1} parent=1 // pred_fallthru
      _
    %v27 = vld [vmem:[%s0] sm:$0x3]
    %v28 = vld [vmem:[%s1] sm:$0xff]
    %v29 = vld [vmem:[%s1 + $0x8] sm:$0xff]
    %v30 = vld [vmem:[%s1 + $0x10] sm:$0xff]
    %v31 = vld [vmem:[%s1 + $0x18] sm:$0xff]
    %v32 = vld [vmem:[%s1 + $0x20] sm:$0xff]
    %v33 = vld [vmem:[%s1 + $0x28] sm:$0xff]
    %v34 = vld [vmem:[%s1 + $0x30] sm:$0xff]
    %v35 = vld [vmem:[%s1 + $0x38] sm:$0xff]
    %v36 = vld [vmem:[%s1 + $0x40] sm:$0xff]
    %v37 = vld [vmem:[%s1 + $0x48] sm:$0xff]
    %v38 = vld [vmem:[%s1 + $0x50] sm:$0xff]
    %v39 = vld [vmem:[%s1 + $0x58] sm:$0xff]
    %v40 = vld [vmem:[%s1 + $0x60] sm:$0xff]
    %v41 = vld [vmem:[%s1 + $0x68] sm:$0xff]
    %v42 = vld [vmem:[%s1 + $0x70] sm:$0xff]
    %v43 = vld [vmem:[%s1 + $0x78] sm:$0xff]
    %45 = vset.pattern.permute.xlu0 0
    %46 = vperm.xlu0 %45, %v28
    %v47 = vpop.permute.xlu0 %46
    %50 = vset.pattern.permute.xlu0 0
    %51 = vperm.xlu0 %50, %v29
    %v52 = vpop.permute.xlu0 %51
    %55 = vset.pattern.permute.xlu0 0
    %56 = vperm.xlu0 %55, %v30
    %v57 = vpop.permute.xlu0 %56
    %60 = vset.pattern.permute.xlu0 0
    %61 = vperm.xlu0 %60, %v31
    %v62 = vpop.permute.xlu0 %61
    %65 = vset.pattern.permute.xlu0 0
    %66 = vperm.xlu0 %65, %v32
    %v67 = vpop.permute.xlu0 %66
    %70 = vset.pattern.permute.xlu0 0
    %71 = vperm.xlu0 %70, %v33
    %v72 = vpop.permute.xlu0 %71
    %75 = vset.pattern.permute.xlu0 0
    %76 = vperm.xlu0 %75, %v34
    %v77 = vpop.permute.xlu0 %76
    %80 = vset.pattern.permute.xlu0 0
    %81 = vperm.xlu0 %80, %v35
    %v82 = vpop.permute.xlu0 %81
    %85 = vset.pattern.permute.xlu0 0
    %86 = vperm.xlu0 %85, %v36
    %v87 = vpop.permute.xlu0 %86
    %90 = vset.pattern.permute.xlu0 0
    %91 = vperm.xlu0 %90, %v37
    %v92 = vpop.permute.xlu0 %91
    %95 = vset.pattern.permute.xlu0 0
    %96 = vperm.xlu0 %95, %v38
    %v97 = vpop.permute.xlu0 %96
    %100 = vset.pattern.permute.xlu0 0
    %101 = vperm.xlu0 %100, %v39
    %v102 = vpop.permute.xlu0 %101
    %105 = vset.pattern.permute.xlu0 0
    %106 = vperm.xlu0 %105, %v40
    %v107 = vpop.permute.xlu0 %106
    %110 = vset.pattern.permute.xlu0 0
    %111 = vperm.xlu0 %110, %v41
    %v112 = vpop.permute.xlu0 %111
    %115 = vset.pattern.permute.xlu0 0
    %116 = vperm.xlu0 %115, %v42
    %v117 = vpop.permute.xlu0 %116
    %120 = vset.pattern.permute.xlu0 0
    %121 = vperm.xlu0 %120, %v43
    %v122 = vpop.permute.xlu0 %121
    %v124 = vperm.slane %v27, 0
    %v125 = vmul.f32 %v47, %v124
    %v126 = vmul.f32 %v52, %v124
    %v127 = vmul.f32 %v57, %v124
    %v128 = vmul.f32 %v62, %v124
    %v129 = vmul.f32 %v67, %v124
    %v130 = vmul.f32 %v72, %v124
    %v131 = vmul.f32 %v77, %v124
    %v132 = vmul.f32 %v82, %v124
    %v133 = vmul.f32 %v87, %v124
    %v134 = vmul.f32 %v92, %v124
    %v135 = vmul.f32 %v97, %v124
    %v136 = vmul.f32 %v102, %v124
    %v137 = vmul.f32 %v107, %v124
    %v138 = vmul.f32 %v112, %v124
    %v139 = vmul.f32 %v117, %v124
    %v140 = vmul.f32 %v122, %v124
    %141 = vset.pattern.permute.xlu0 1
    %142 = vperm.xlu0 %141, %v28
    %v143 = vpop.permute.xlu0 %142
    %145 = vset.pattern.permute.xlu0 1
    %146 = vperm.xlu0 %145, %v29
    %v147 = vpop.permute.xlu0 %146
    %149 = vset.pattern.permute.xlu0 1
    %150 = vperm.xlu0 %149, %v30
    %v151 = vpop.permute.xlu0 %150
    %153 = vset.pattern.permute.xlu0 1
    %154 = vperm.xlu0 %153, %v31
    %v155 = vpop.permute.xlu0 %154
    %157 = vset.pattern.permute.xlu0 1
    %158 = vperm.xlu0 %157, %v32
    %v159 = vpop.permute.xlu0 %158
    %161 = vset.pattern.permute.xlu0 1
    %162 = vperm.xlu0 %161, %v33
    %v163 = vpop.permute.xlu0 %162
    %165 = vset.pattern.permute.xlu0 1
    %166 = vperm.xlu0 %165, %v34
    %v167 = vpop.permute.xlu0 %166
    %169 = vset.pattern.permute.xlu0 1
    %170 = vperm.xlu0 %169, %v35
    %v171 = vpop.permute.xlu0 %170
    %173 = vset.pattern.permute.xlu0 1
    %174 = vperm.xlu0 %173, %v36
    %v175 = vpop.permute.xlu0 %174
    %177 = vset.pattern.permute.xlu0 1
    %178 = vperm.xlu0 %177, %v37
    %v179 = vpop.permute.xlu0 %178
    %181 = vset.pattern.permute.xlu0 1
    %182 = vperm.xlu0 %181, %v38
    %v183 = vpop.permute.xlu0 %182
    %185 = vset.pattern.permute.xlu0 1
    %186 = vperm.xlu0 %185, %v39
    %v187 = vpop.permute.xlu0 %186
    %189 = vset.pattern.permute.xlu0 1
    %190 = vperm.xlu0 %189, %v40
    %v191 = vpop.permute.xlu0 %190
    %193 = vset.pattern.permute.xlu0 1
    %194 = vperm.xlu0 %193, %v41
    %v195 = vpop.permute.xlu0 %194
    %197 = vset.pattern.permute.xlu0 1
    %198 = vperm.xlu0 %197, %v42
    %v199 = vpop.permute.xlu0 %198
    %201 = vset.pattern.permute.xlu0 1
    %202 = vperm.xlu0 %201, %v43
    %v203 = vpop.permute.xlu0 %202
    %v205 = vperm.slane %v27, 1
    %v206 = vmul.f32 %v143, %v205
    %v207 = vmul.f32 %v147, %v205
    %v208 = vmul.f32 %v151, %v205
    %v209 = vmul.f32 %v155, %v205
    %v210 = vmul.f32 %v159, %v205
    %v211 = vmul.f32 %v163, %v205
    %v212 = vmul.f32 %v167, %v205
    %v213 = vmul.f32 %v171, %v205
    %v214 = vmul.f32 %v175, %v205
    %v215 = vmul.f32 %v179, %v205
    %v216 = vmul.f32 %v183, %v205
    %v217 = vmul.f32 %v187, %v205
    %v218 = vmul.f32 %v191, %v205
    %v219 = vmul.f32 %v195, %v205
    %v220 = vmul.f32 %v199, %v205
    %v221 = vmul.f32 %v203, %v205
    %v222 = vadd.f32 %v125, %v206
    %v223 = vadd.f32 %v126, %v207
    %v224 = vadd.f32 %v127, %v208
    %v225 = vadd.f32 %v128, %v209
    %v226 = vadd.f32 %v129, %v210
    %v227 = vadd.f32 %v130, %v211
    %v228 = vadd.f32 %v131, %v212
    %v229 = vadd.f32 %v132, %v213
    %v230 = vadd.f32 %v133, %v214
    %v231 = vadd.f32 %v134, %v215
    %v232 = vadd.f32 %v135, %v216
    %v233 = vadd.f32 %v136, %v217
    %v234 = vadd.f32 %v137, %v218
    %v235 = vadd.f32 %v138, %v219
    %v236 = vadd.f32 %v139, %v220
    %v237 = vadd.f32 %v140, %v221
    %v238 = vld [vmem:[%s2] sm:$0xff]
    %v239 = vld [vmem:[%s2 + $0x8] sm:$0xff]
    %v240 = vld [vmem:[%s2 + $0x10] sm:$0xff]
    %v241 = vld [vmem:[%s2 + $0x18] sm:$0xff]
    %v242 = vld [vmem:[%s2 + $0x20] sm:$0xff]
    %v243 = vld [vmem:[%s2 + $0x28] sm:$0xff]
    %v244 = vld [vmem:[%s2 + $0x30] sm:$0xff]
    %v245 = vld [vmem:[%s2 + $0x38] sm:$0xff]
    %v246 = vld [vmem:[%s2 + $0x40] sm:$0xff]
    %v247 = vld [vmem:[%s2 + $0x48] sm:$0xff]
    %v248 = vld [vmem:[%s2 + $0x50] sm:$0xff]
    %v249 = vld [vmem:[%s2 + $0x58] sm:$0xff]
    %v250 = vld [vmem:[%s2 + $0x60] sm:$0xff]
    %v251 = vld [vmem:[%s2 + $0x68] sm:$0xff]
    %v252 = vld [vmem:[%s2 + $0x70] sm:$0xff]
    %v253 = vld [vmem:[%s2 + $0x78] sm:$0xff]
    %255 = vset.pattern.permute.xlu0 0
    %256 = vperm.xlu0 %255, %v238
    %v257 = vpop.permute.xlu0 %256
    %260 = vset.pattern.permute.xlu0 0
    %261 = vperm.xlu0 %260, %v239
    %v262 = vpop.permute.xlu0 %261
    %265 = vset.pattern.permute.xlu0 0
    %266 = vperm.xlu0 %265, %v240
    %v267 = vpop.permute.xlu0 %266
    %270 = vset.pattern.permute.xlu0 0
    %271 = vperm.xlu0 %270, %v241
    %v272 = vpop.permute.xlu0 %271
    %275 = vset.pattern.permute.xlu0 0
    %276 = vperm.xlu0 %275, %v242
    %v277 = vpop.permute.xlu0 %276
    %280 = vset.pattern.permute.xlu0 0
    %281 = vperm.xlu0 %280, %v243
    %v282 = vpop.permute.xlu0 %281
    %285 = vset.pattern.permute.xlu0 0
    %286 = vperm.xlu0 %285, %v244
    %v287 = vpop.permute.xlu0 %286
    %290 = vset.pattern.permute.xlu0 0
    %291 = vperm.xlu0 %290, %v245
    %v292 = vpop.permute.xlu0 %291
    %295 = vset.pattern.permute.xlu0 0
    %296 = vperm.xlu0 %295, %v246
    %v297 = vpop.permute.xlu0 %296
    %300 = vset.pattern.permute.xlu0 0
    %301 = vperm.xlu0 %300, %v247
    %v302 = vpop.permute.xlu0 %301
    %305 = vset.pattern.permute.xlu0 0
    %306 = vperm.xlu0 %305, %v248
    %v307 = vpop.permute.xlu0 %306
    %310 = vset.pattern.permute.xlu0 0
    %311 = vperm.xlu0 %310, %v249
    %v312 = vpop.permute.xlu0 %311
    %315 = vset.pattern.permute.xlu0 0
    %316 = vperm.xlu0 %315, %v250
    %v317 = vpop.permute.xlu0 %316
    %320 = vset.pattern.permute.xlu0 0
    %321 = vperm.xlu0 %320, %v251
    %v322 = vpop.permute.xlu0 %321
    %325 = vset.pattern.permute.xlu0 0
    %326 = vperm.xlu0 %325, %v252
    %v327 = vpop.permute.xlu0 %326
    %330 = vset.pattern.permute.xlu0 0
    %331 = vperm.xlu0 %330, %v253
    %v332 = vpop.permute.xlu0 %331
    %v334 = vadd.f32 %v222, %v257
    %v335 = vadd.f32 %v223, %v262
    %v336 = vadd.f32 %v224, %v267
    %v337 = vadd.f32 %v225, %v272
    %v338 = vadd.f32 %v226, %v277
    %v339 = vadd.f32 %v227, %v282
    %v340 = vadd.f32 %v228, %v287
    %v341 = vadd.f32 %v229, %v292
    %v342 = vadd.f32 %v230, %v297
    %v343 = vadd.f32 %v231, %v302
    %v344 = vadd.f32 %v232, %v307
    %v345 = vadd.f32 %v233, %v312
    %v346 = vadd.f32 %v234, %v317
    %v347 = vadd.f32 %v235, %v322
    %v348 = vadd.f32 %v236, %v327
    %v349 = vadd.f32 %v237, %v332
    %v350 = vsub.f32 0.0, %v334
    %v351 = vsub.f32 0.0, %v335
    %v352 = vsub.f32 0.0, %v336
    %v353 = vsub.f32 0.0, %v337
    %v354 = vsub.f32 0.0, %v338
    %v355 = vsub.f32 0.0, %v339
    %v356 = vsub.f32 0.0, %v340
    %v357 = vsub.f32 0.0, %v341
    %v358 = vsub.f32 0.0, %v342
    %v359 = vsub.f32 0.0, %v343
    %v360 = vsub.f32 0.0, %v344
    %v361 = vsub.f32 0.0, %v345
    %v362 = vsub.f32 0.0, %v346
    %v363 = vsub.f32 0.0, %v347
    %v364 = vsub.f32 0.0, %v348
    %v365 = vsub.f32 0.0, %v349
    %v366 = vmul.f32 %v350, 1.442695
    %v367 = vpow.pop %v366
    %v368 = vmul.f32 %v351, 1.442695
    %v369 = vpow.pop %v368
    %v370 = vmul.f32 %v352, 1.442695
    %v371 = vpow.pop %v370
    %v372 = vmul.f32 %v353, 1.442695
    %v373 = vpow.pop %v372
    %v374 = vmul.f32 %v354, 1.442695
    %v375 = vpow.pop %v374
    %v376 = vmul.f32 %v355, 1.442695
    %v377 = vpow.pop %v376
    %v378 = vmul.f32 %v356, 1.442695
    %v379 = vpow.pop %v378
    %v380 = vmul.f32 %v357, 1.442695
    %v381 = vpow.pop %v380
    %v382 = vmul.f32 %v358, 1.442695
    %v383 = vpow.pop %v382
    %v384 = vmul.f32 %v359, 1.442695
    %v385 = vpow.pop %v384
    %v386 = vmul.f32 %v360, 1.442695
    %v387 = vpow.pop %v386
    %v388 = vmul.f32 %v361, 1.442695
    %v389 = vpow.pop %v388
    %v390 = vmul.f32 %v362, 1.442695
    %v391 = vpow.pop %v390
    %v392 = vmul.f32 %v363, 1.442695
    %v393 = vpow.pop %v392
    %v394 = vmul.f32 %v364, 1.442695
    %v395 = vpow.pop %v394
    %v396 = vmul.f32 %v365, 1.442695
    %v397 = vpow.pop %v396
    %v398 = vadd.f32 %v367, 1.0
    %v399 = vadd.f32 %v369, 1.0
    %v400 = vadd.f32 %v371, 1.0
    %v401 = vadd.f32 %v373, 1.0
    %v402 = vadd.f32 %v375, 1.0
    %v403 = vadd.f32 %v377, 1.0
    %v404 = vadd.f32 %v379, 1.0
    %v405 = vadd.f32 %v381, 1.0
    %v406 = vadd.f32 %v383, 1.0
    %v407 = vadd.f32 %v385, 1.0
    %v408 = vadd.f32 %v387, 1.0
    %v409 = vadd.f32 %v389, 1.0
    %v410 = vadd.f32 %v391, 1.0
    %v411 = vadd.f32 %v393, 1.0
    %v412 = vadd.f32 %v395, 1.0
    %v413 = vadd.f32 %v397, 1.0
    %v414 = vrcp.pop %v398
    %v415 = vmul.f32 %v398, %v414
    %v416 = vsub.f32 1.0, %v415
    %v417 = vmul.f32 %v414, %v416
    %v418 = vadd.f32 %v414, %v417
    %vm419 = vweird.f32 %v398
    %vm420 = vweird.f32 %v414
    %vm421 = vmor %vm419, %vm420
    %v422 = vsel %vm421, %v414, %v418
    %v423 = vand.u32 2147483647, %v398
    %vm424 = vcmp.eq.f32.partialorder %v423, 8.507059e+37
    %v425 = vand.u32 %v398, 2147483648
    %v426 = vor.u32 1.1754944e-38, %v425
    %v427 = vsel %vm424, %v426, %v422
    %v428 = vmul.f32 1.0, %v427
    %v429 = vrcp.pop %v399
    %v430 = vmul.f32 %v399, %v429
    %v431 = vsub.f32 1.0, %v430
    %v432 = vmul.f32 %v429, %v431
    %v433 = vadd.f32 %v429, %v432
    %vm434 = vweird.f32 %v399
    %vm435 = vweird.f32 %v429
    %vm436 = vmor %vm434, %vm435
    %v437 = vsel %vm436, %v429, %v433
    %v438 = vand.u32 2147483647, %v399
    %vm439 = vcmp.eq.f32.partialorder %v438, 8.507059e+37
    %v440 = vand.u32 %v399, 2147483648
    %v441 = vor.u32 1.1754944e-38, %v440
    %v442 = vsel %vm439, %v441, %v437
    %v443 = vmul.f32 1.0, %v442
    %v444 = vrcp.pop %v400
    %v445 = vmul.f32 %v400, %v444
    %v446 = vsub.f32 1.0, %v445
    %v447 = vmul.f32 %v444, %v446
    %v448 = vadd.f32 %v444, %v447
    %vm449 = vweird.f32 %v400
    %vm450 = vweird.f32 %v444
    %vm451 = vmor %vm449, %vm450
    %v452 = vsel %vm451, %v444, %v448
    %v453 = vand.u32 2147483647, %v400
    %vm454 = vcmp.eq.f32.partialorder %v453, 8.507059e+37
    %v455 = vand.u32 %v400, 2147483648
    %v456 = vor.u32 1.1754944e-38, %v455
    %v457 = vsel %vm454, %v456, %v452
    %v458 = vmul.f32 1.0, %v457
    %v459 = vrcp.pop %v401
    %v460 = vmul.f32 %v401, %v459
    %v461 = vsub.f32 1.0, %v460
    %v462 = vmul.f32 %v459, %v461
    %v463 = vadd.f32 %v459, %v462
    %vm464 = vweird.f32 %v401
    %vm465 = vweird.f32 %v459
    %vm466 = vmor %vm464, %vm465
    %v467 = vsel %vm466, %v459, %v463
    %v468 = vand.u32 2147483647, %v401
    %vm469 = vcmp.eq.f32.partialorder %v468, 8.507059e+37
    %v470 = vand.u32 %v401, 2147483648
    %v471 = vor.u32 1.1754944e-38, %v470
    %v472 = vsel %vm469, %v471, %v467
    %v473 = vmul.f32 1.0, %v472
    %v474 = vrcp.pop %v402
    %v475 = vmul.f32 %v402, %v474
    %v476 = vsub.f32 1.0, %v475
    %v477 = vmul.f32 %v474, %v476
    %v478 = vadd.f32 %v474, %v477
    %vm479 = vweird.f32 %v402
    %vm480 = vweird.f32 %v474
    %vm481 = vmor %vm479, %vm480
    %v482 = vsel %vm481, %v474, %v478
    %v483 = vand.u32 2147483647, %v402
    %vm484 = vcmp.eq.f32.partialorder %v483, 8.507059e+37
    %v485 = vand.u32 %v402, 2147483648
    %v486 = vor.u32 1.1754944e-38, %v485
    %v487 = vsel %vm484, %v486, %v482
    %v488 = vmul.f32 1.0, %v487
    %v489 = vrcp.pop %v403
    %v490 = vmul.f32 %v403, %v489
    %v491 = vsub.f32 1.0, %v490
    %v492 = vmul.f32 %v489, %v491
    %v493 = vadd.f32 %v489, %v492
    %vm494 = vweird.f32 %v403
    %vm495 = vweird.f32 %v489
    %vm496 = vmor %vm494, %vm495
    %v497 = vsel %vm496, %v489, %v493
    %v498 = vand.u32 2147483647, %v403
    %vm499 = vcmp.eq.f32.partialorder %v498, 8.507059e+37
    %v500 = vand.u32 %v403, 2147483648
    %v501 = vor.u32 1.1754944e-38, %v500
    %v502 = vsel %vm499, %v501, %v497
    %v503 = vmul.f32 1.0, %v502
    %v504 = vrcp.pop %v404
    %v505 = vmul.f32 %v404, %v504
    %v506 = vsub.f32 1.0, %v505
    %v507 = vmul.f32 %v504, %v506
    %v508 = vadd.f32 %v504, %v507
    %vm509 = vweird.f32 %v404
    %vm510 = vweird.f32 %v504
    %vm511 = vmor %vm509, %vm510
    %v512 = vsel %vm511, %v504, %v508
    %v513 = vand.u32 2147483647, %v404
    %vm514 = vcmp.eq.f32.partialorder %v513, 8.507059e+37
    %v515 = vand.u32 %v404, 2147483648
    %v516 = vor.u32 1.1754944e-38, %v515
    %v517 = vsel %vm514, %v516, %v512
    %v518 = vmul.f32 1.0, %v517
    %v519 = vrcp.pop %v405
    %v520 = vmul.f32 %v405, %v519
    %v521 = vsub.f32 1.0, %v520
    %v522 = vmul.f32 %v519, %v521
    %v523 = vadd.f32 %v519, %v522
    %vm524 = vweird.f32 %v405
    %vm525 = vweird.f32 %v519
    %vm526 = vmor %vm524, %vm525
    %v527 = vsel %vm526, %v519, %v523
    %v528 = vand.u32 2147483647, %v405
    %vm529 = vcmp.eq.f32.partialorder %v528, 8.507059e+37
    %v530 = vand.u32 %v405, 2147483648
    %v531 = vor.u32 1.1754944e-38, %v530
    %v532 = vsel %vm529, %v531, %v527
    %v533 = vmul.f32 1.0, %v532
    %v534 = vrcp.pop %v406
    %v535 = vmul.f32 %v406, %v534
    %v536 = vsub.f32 1.0, %v535
    %v537 = vmul.f32 %v534, %v536
    %v538 = vadd.f32 %v534, %v537
    %vm539 = vweird.f32 %v406
    %vm540 = vweird.f32 %v534
    %vm541 = vmor %vm539, %vm540
    %v542 = vsel %vm541, %v534, %v538
    %v543 = vand.u32 2147483647, %v406
    %vm544 = vcmp.eq.f32.partialorder %v543, 8.507059e+37
    %v545 = vand.u32 %v406, 2147483648
    %v546 = vor.u32 1.1754944e-38, %v545
    %v547 = vsel %vm544, %v546, %v542
    %v548 = vmul.f32 1.0, %v547
    %v549 = vrcp.pop %v407
    %v550 = vmul.f32 %v407, %v549
    %v551 = vsub.f32 1.0, %v550
    %v552 = vmul.f32 %v549, %v551
    %v553 = vadd.f32 %v549, %v552
    %vm554 = vweird.f32 %v407
    %vm555 = vweird.f32 %v549
    %vm556 = vmor %vm554, %vm555
    %v557 = vsel %vm556, %v549, %v553
    %v558 = vand.u32 2147483647, %v407
    %vm559 = vcmp.eq.f32.partialorder %v558, 8.507059e+37
    %v560 = vand.u32 %v407, 2147483648
    %v561 = vor.u32 1.1754944e-38, %v560
    %v562 = vsel %vm559, %v561, %v557
    %v563 = vmul.f32 1.0, %v562
    %v564 = vrcp.pop %v408
    %v565 = vmul.f32 %v408, %v564
    %v566 = vsub.f32 1.0, %v565
    %v567 = vmul.f32 %v564, %v566
    %v568 = vadd.f32 %v564, %v567
    %vm569 = vweird.f32 %v408
    %vm570 = vweird.f32 %v564
    %vm571 = vmor %vm569, %vm570
    %v572 = vsel %vm571, %v564, %v568
    %v573 = vand.u32 2147483647, %v408
    %vm574 = vcmp.eq.f32.partialorder %v573, 8.507059e+37
    %v575 = vand.u32 %v408, 2147483648
    %v576 = vor.u32 1.1754944e-38, %v575
    %v577 = vsel %vm574, %v576, %v572
    %v578 = vmul.f32 1.0, %v577
    %v579 = vrcp.pop %v409
    %v580 = vmul.f32 %v409, %v579
    %v581 = vsub.f32 1.0, %v580
    %v582 = vmul.f32 %v579, %v581
    %v583 = vadd.f32 %v579, %v582
    %vm584 = vweird.f32 %v409
    %vm585 = vweird.f32 %v579
    %vm586 = vmor %vm584, %vm585
    %v587 = vsel %vm586, %v579, %v583
    %v588 = vand.u32 2147483647, %v409
    %vm589 = vcmp.eq.f32.partialorder %v588, 8.507059e+37
    %v590 = vand.u32 %v409, 2147483648
    %v591 = vor.u32 1.1754944e-38, %v590
    %v592 = vsel %vm589, %v591, %v587
    %v593 = vmul.f32 1.0, %v592
    %v594 = vrcp.pop %v410
    %v595 = vmul.f32 %v410, %v594
    %v596 = vsub.f32 1.0, %v595
    %v597 = vmul.f32 %v594, %v596
    %v598 = vadd.f32 %v594, %v597
    %vm599 = vweird.f32 %v410
    %vm600 = vweird.f32 %v594
    %vm601 = vmor %vm599, %vm600
    %v602 = vsel %vm601, %v594, %v598
    %v603 = vand.u32 2147483647, %v410
    %vm604 = vcmp.eq.f32.partialorder %v603, 8.507059e+37
    %v605 = vand.u32 %v410, 2147483648
    %v606 = vor.u32 1.1754944e-38, %v605
    %v607 = vsel %vm604, %v606, %v602
    %v608 = vmul.f32 1.0, %v607
    %v609 = vrcp.pop %v411
    %v610 = vmul.f32 %v411, %v609
    %v611 = vsub.f32 1.0, %v610
    %v612 = vmul.f32 %v609, %v611
    %v613 = vadd.f32 %v609, %v612
    %vm614 = vweird.f32 %v411
    %vm615 = vweird.f32 %v609
    %vm616 = vmor %vm614, %vm615
    %v617 = vsel %vm616, %v609, %v613
    %v618 = vand.u32 2147483647, %v411
    %vm619 = vcmp.eq.f32.partialorder %v618, 8.507059e+37
    %v620 = vand.u32 %v411, 2147483648
    %v621 = vor.u32 1.1754944e-38, %v620
    %v622 = vsel %vm619, %v621, %v617
    %v623 = vmul.f32 1.0, %v622
    %v624 = vrcp.pop %v412
    %v625 = vmul.f32 %v412, %v624
    %v626 = vsub.f32 1.0, %v625
    %v627 = vmul.f32 %v624, %v626
    %v628 = vadd.f32 %v624, %v627
    %vm629 = vweird.f32 %v412
    %vm630 = vweird.f32 %v624
    %vm631 = vmor %vm629, %vm630
    %v632 = vsel %vm631, %v624, %v628
    %v633 = vand.u32 2147483647, %v412
    %vm634 = vcmp.eq.f32.partialorder %v633, 8.507059e+37
    %v635 = vand.u32 %v412, 2147483648
    %v636 = vor.u32 1.1754944e-38, %v635
    %v637 = vsel %vm634, %v636, %v632
    %v638 = vmul.f32 1.0, %v637
    %v639 = vrcp.pop %v413
    %v640 = vmul.f32 %v413, %v639
    %v641 = vsub.f32 1.0, %v640
    %v642 = vmul.f32 %v639, %v641
    %v643 = vadd.f32 %v639, %v642
    %vm644 = vweird.f32 %v413
    %vm645 = vweird.f32 %v639
    %vm646 = vmor %vm644, %vm645
    %v647 = vsel %vm646, %v639, %v643
    %v648 = vand.u32 2147483647, %v413
    %vm649 = vcmp.eq.f32.partialorder %v648, 8.507059e+37
    %v650 = vand.u32 %v413, 2147483648
    %v651 = vor.u32 1.1754944e-38, %v650
    %v652 = vsel %vm649, %v651, %v647
    %v653 = vmul.f32 1.0, %v652
    %v654 = vld [vmem:[%s3] sm:$0xff]
    %v655 = vld [vmem:[%s3 + $0x8] sm:$0xff]
    %v656 = vld [vmem:[%s3 + $0x10] sm:$0xff]
    %v657 = vld [vmem:[%s3 + $0x18] sm:$0xff]
    %v658 = vld [vmem:[%s3 + $0x20] sm:$0xff]
    %v659 = vld [vmem:[%s3 + $0x28] sm:$0xff]
    %v660 = vld [vmem:[%s3 + $0x30] sm:$0xff]
    %v661 = vld [vmem:[%s3 + $0x38] sm:$0xff]
    %v662 = vld [vmem:[%s3 + $0x40] sm:$0xff]
    %v663 = vld [vmem:[%s3 + $0x48] sm:$0xff]
    %v664 = vld [vmem:[%s3 + $0x50] sm:$0xff]
    %v665 = vld [vmem:[%s3 + $0x58] sm:$0xff]
    %v666 = vld [vmem:[%s3 + $0x60] sm:$0xff]
    %v667 = vld [vmem:[%s3 + $0x68] sm:$0xff]
    %v668 = vld [vmem:[%s3 + $0x70] sm:$0xff]
    %v669 = vld [vmem:[%s3 + $0x78] sm:$0xff]
    %v670 = vld [vmem:[%s4] sm:$0xff]
    %v671 = vld [vmem:[%s4 + $0x8] sm:$0xff]
    %v672 = vld [vmem:[%s4 + $0x10] sm:$0xff]
    %v673 = vld [vmem:[%s4 + $0x18] sm:$0xff]
    %v674 = vld [vmem:[%s4 + $0x20] sm:$0xff]
    %v675 = vld [vmem:[%s4 + $0x28] sm:$0xff]
    %v676 = vld [vmem:[%s4 + $0x30] sm:$0xff]
    %v677 = vld [vmem:[%s4 + $0x38] sm:$0xff]
    %v678 = vld [vmem:[%s4 + $0x40] sm:$0xff]
    %v679 = vld [vmem:[%s4 + $0x48] sm:$0xff]
    %v680 = vld [vmem:[%s4 + $0x50] sm:$0xff]
    %v681 = vld [vmem:[%s4 + $0x58] sm:$0xff]
    %v682 = vld [vmem:[%s4 + $0x60] sm:$0xff]
    %v683 = vld [vmem:[%s4 + $0x68] sm:$0xff]
    %v684 = vld [vmem:[%s4 + $0x70] sm:$0xff]
    %v685 = vld [vmem:[%s4 + $0x78] sm:$0xff]
    %687 = vset.pattern.permute.xlu0 0
    %688 = vperm.xlu0 %687, %v670
    %v689 = vpop.permute.xlu0 %688
    %692 = vset.pattern.permute.xlu0 0
    %693 = vperm.xlu0 %692, %v671
    %v694 = vpop.permute.xlu0 %693
    %697 = vset.pattern.permute.xlu0 0
    %698 = vperm.xlu0 %697, %v672
    %v699 = vpop.permute.xlu0 %698
    %702 = vset.pattern.permute.xlu0 0
    %703 = vperm.xlu0 %702, %v673
    %v704 = vpop.permute.xlu0 %703
    %707 = vset.pattern.permute.xlu0 0
    %708 = vperm.xlu0 %707, %v674
    %v709 = vpop.permute.xlu0 %708
    %712 = vset.pattern.permute.xlu0 0
    %713 = vperm.xlu0 %712, %v675
    %v714 = vpop.permute.xlu0 %713
    %717 = vset.pattern.permute.xlu0 0
    %718 = vperm.xlu0 %717, %v676
    %v719 = vpop.permute.xlu0 %718
    %722 = vset.pattern.permute.xlu0 0
    %723 = vperm.xlu0 %722, %v677
    %v724 = vpop.permute.xlu0 %723
    %727 = vset.pattern.permute.xlu0 0
    %728 = vperm.xlu0 %727, %v678
    %v729 = vpop.permute.xlu0 %728
    %732 = vset.pattern.permute.xlu0 0
    %733 = vperm.xlu0 %732, %v679
    %v734 = vpop.permute.xlu0 %733
    %737 = vset.pattern.permute.xlu0 0
    %738 = vperm.xlu0 %737, %v680
    %v739 = vpop.permute.xlu0 %738
    %742 = vset.pattern.permute.xlu0 0
    %743 = vperm.xlu0 %742, %v681
    %v744 = vpop.permute.xlu0 %743
    %747 = vset.pattern.permute.xlu0 0
    %748 = vperm.xlu0 %747, %v682
    %v749 = vpop.permute.xlu0 %748
    %752 = vset.pattern.permute.xlu0 0
    %753 = vperm.xlu0 %752, %v683
    %v754 = vpop.permute.xlu0 %753
    %757 = vset.pattern.permute.xlu0 0
    %758 = vperm.xlu0 %757, %v684
    %v759 = vpop.permute.xlu0 %758
    %762 = vset.pattern.permute.xlu0 0
    %763 = vperm.xlu0 %762, %v685
    %v764 = vpop.permute.xlu0 %763
    %766 = vmatpush.msra.mxu0 %v653
    %767 = vmatpush.msra.mxu0 %v638
    %768 = vmatpush.msra.mxu0 %v623
    %769 = vmatpush.msra.mxu0 %v608
    %770 = vmatpush.msra.mxu0 %v593
    %771 = vmatpush.msra.mxu0 %v578
    %772 = vmatpush.msra.mxu0 %v563
    %773 = vmatpush.msra.mxu0 %v548
    %774 = vmatpush.msra.mxu0 %v533
    %775 = vmatpush.msra.mxu0 %v518
    %776 = vmatpush.msra.mxu0 %v503
    %777 = vmatpush.msra.mxu0 %v488
    %778 = vmatpush.msra.mxu0 %v473
    %779 = vmatpush.msra.mxu0 %v458
    %780 = vmatpush.msra.mxu0 %v443
    %781 = vmatpush.msra.mxu0 %v428
    %782 = vmatmul.f32.gmra.mxu0 %v654
    %v783 = vpop.f32.mrf.mxu0
    %v784 = vadd.f32 %v689, %v783
    %785 = vmatmul.f32.gmra.mxu0 %v655
    %v786 = vpop.f32.mrf.mxu0
    %v787 = vadd.f32 %v694, %v786
    %788 = vmatmul.f32.gmra.mxu0 %v656
    %v789 = vpop.f32.mrf.mxu0
    %v790 = vadd.f32 %v699, %v789
    %791 = vmatmul.f32.gmra.mxu0 %v657
    %v792 = vpop.f32.mrf.mxu0
    %v793 = vadd.f32 %v704, %v792
    %794 = vmatmul.f32.gmra.mxu0 %v658
    %v795 = vpop.f32.mrf.mxu0
    %v796 = vadd.f32 %v709, %v795
    %797 = vmatmul.f32.gmra.mxu0 %v659
    %v798 = vpop.f32.mrf.mxu0
    %v799 = vadd.f32 %v714, %v798
    %800 = vmatmul.f32.gmra.mxu0 %v660
    %v801 = vpop.f32.mrf.mxu0
    %v802 = vadd.f32 %v719, %v801
    %803 = vmatmul.f32.gmra.mxu0 %v661
    %v804 = vpop.f32.mrf.mxu0
    %v805 = vadd.f32 %v724, %v804
    %806 = vmatmul.f32.gmra.mxu0 %v662
    %v807 = vpop.f32.mrf.mxu0
    %v808 = vadd.f32 %v729, %v807
    %809 = vmatmul.f32.gmra.mxu0 %v663
    %v810 = vpop.f32.mrf.mxu0
    %v811 = vadd.f32 %v734, %v810
    %812 = vmatmul.f32.gmra.mxu0 %v664
    %v813 = vpop.f32.mrf.mxu0
    %v814 = vadd.f32 %v739, %v813
    %815 = vmatmul.f32.gmra.mxu0 %v665
    %v816 = vpop.f32.mrf.mxu0
    %v817 = vadd.f32 %v744, %v816
    %818 = vmatmul.f32.gmra.mxu0 %v666
    %v819 = vpop.f32.mrf.mxu0
    %v820 = vadd.f32 %v749, %v819
    %821 = vmatmul.f32.gmra.mxu0 %v667
    %v822 = vpop.f32.mrf.mxu0
    %v823 = vadd.f32 %v754, %v822
    %824 = vmatmul.f32.gmra.mxu0 %v668
    %v825 = vpop.f32.mrf.mxu0
    %v826 = vadd.f32 %v759, %v825
    %827 = vmatmul.f32.gmra.mxu0 %v669
    %v828 = vpop.f32.mrf.mxu0
    %v829 = vadd.f32 %v764, %v828
    %830 = vdwg.mxu0
    %v831 = vsub.f32 0.0, %v784
    %v832 = vsub.f32 0.0, %v787
    %v833 = vsub.f32 0.0, %v790
    %v834 = vsub.f32 0.0, %v793
    %v835 = vsub.f32 0.0, %v796
    %v836 = vsub.f32 0.0, %v799
    %v837 = vsub.f32 0.0, %v802
    %v838 = vsub.f32 0.0, %v805
    %v839 = vsub.f32 0.0, %v808
    %v840 = vsub.f32 0.0, %v811
    %v841 = vsub.f32 0.0, %v814
    %v842 = vsub.f32 0.0, %v817
    %v843 = vsub.f32 0.0, %v820
    %v844 = vsub.f32 0.0, %v823
    %v845 = vsub.f32 0.0, %v826
    %v846 = vsub.f32 0.0, %v829
    %v847 = vmul.f32 %v831, 1.442695
    %v848 = vpow.pop %v847
    %v849 = vmul.f32 %v832, 1.442695
    %v850 = vpow.pop %v849
    %v851 = vmul.f32 %v833, 1.442695
    %v852 = vpow.pop %v851
    %v853 = vmul.f32 %v834, 1.442695
    %v854 = vpow.pop %v853
    %v855 = vmul.f32 %v835, 1.442695
    %v856 = vpow.pop %v855
    %v857 = vmul.f32 %v836, 1.442695
    %v858 = vpow.pop %v857
    %v859 = vmul.f32 %v837, 1.442695
    %v860 = vpow.pop %v859
    %v861 = vmul.f32 %v838, 1.442695
    %v862 = vpow.pop %v861
    %v863 = vmul.f32 %v839, 1.442695
    %v864 = vpow.pop %v863
    %v865 = vmul.f32 %v840, 1.442695
    %v866 = vpow.pop %v865
    %v867 = vmul.f32 %v841, 1.442695
    %v868 = vpow.pop %v867
    %v869 = vmul.f32 %v842, 1.442695
    %v870 = vpow.pop %v869
    %v871 = vmul.f32 %v843, 1.442695
    %v872 = vpow.pop %v871
    %v873 = vmul.f32 %v844, 1.442695
    %v874 = vpow.pop %v873
    %v875 = vmul.f32 %v845, 1.442695
    %v876 = vpow.pop %v875
    %v877 = vmul.f32 %v846, 1.442695
    %v878 = vpow.pop %v877
    %v879 = vadd.f32 %v848, 1.0
    %v880 = vadd.f32 %v850, 1.0
    %v881 = vadd.f32 %v852, 1.0
    %v882 = vadd.f32 %v854, 1.0
    %v883 = vadd.f32 %v856, 1.0
    %v884 = vadd.f32 %v858, 1.0
    %v885 = vadd.f32 %v860, 1.0
    %v886 = vadd.f32 %v862, 1.0
    %v887 = vadd.f32 %v864, 1.0
    %v888 = vadd.f32 %v866, 1.0
    %v889 = vadd.f32 %v868, 1.0
    %v890 = vadd.f32 %v870, 1.0
    %v891 = vadd.f32 %v872, 1.0
    %v892 = vadd.f32 %v874, 1.0
    %v893 = vadd.f32 %v876, 1.0
    %v894 = vadd.f32 %v878, 1.0
    %v895 = vrcp.pop %v879
    %v896 = vmul.f32 %v879, %v895
    %v897 = vsub.f32 1.0, %v896
    %v898 = vmul.f32 %v895, %v897
    %v899 = vadd.f32 %v895, %v898
    %vm900 = vweird.f32 %v879
    %vm901 = vweird.f32 %v895
    %vm902 = vmor %vm900, %vm901
    %v903 = vsel %vm902, %v895, %v899
    %v904 = vand.u32 2147483647, %v879
    %vm905 = vcmp.eq.f32.partialorder %v904, 8.507059e+37
    %v906 = vand.u32 %v879, 2147483648
    %v907 = vor.u32 1.1754944e-38, %v906
    %v908 = vsel %vm905, %v907, %v903
    %v909 = vmul.f32 1.0, %v908
    %v910 = vrcp.pop %v880
    %v911 = vmul.f32 %v880, %v910
    %v912 = vsub.f32 1.0, %v911
    %v913 = vmul.f32 %v910, %v912
    %v914 = vadd.f32 %v910, %v913
    %vm915 = vweird.f32 %v880
    %vm916 = vweird.f32 %v910
    %vm917 = vmor %vm915, %vm916
    %v918 = vsel %vm917, %v910, %v914
    %v919 = vand.u32 2147483647, %v880
    %vm920 = vcmp.eq.f32.partialorder %v919, 8.507059e+37
    %v921 = vand.u32 %v880, 2147483648
    %v922 = vor.u32 1.1754944e-38, %v921
    %v923 = vsel %vm920, %v922, %v918
    %v924 = vmul.f32 1.0, %v923
    %v925 = vrcp.pop %v881
    %v926 = vmul.f32 %v881, %v925
    %v927 = vsub.f32 1.0, %v926
    %v928 = vmul.f32 %v925, %v927
    %v929 = vadd.f32 %v925, %v928
    %vm930 = vweird.f32 %v881
    %vm931 = vweird.f32 %v925
    %vm932 = vmor %vm930, %vm931
    %v933 = vsel %vm932, %v925, %v929
    %v934 = vand.u32 2147483647, %v881
    %vm935 = vcmp.eq.f32.partialorder %v934, 8.507059e+37
    %v936 = vand.u32 %v881, 2147483648
    %v937 = vor.u32 1.1754944e-38, %v936
    %v938 = vsel %vm935, %v937, %v933
    %v939 = vmul.f32 1.0, %v938
    %v940 = vrcp.pop %v882
    %v941 = vmul.f32 %v882, %v940
    %v942 = vsub.f32 1.0, %v941
    %v943 = vmul.f32 %v940, %v942
    %v944 = vadd.f32 %v940, %v943
    %vm945 = vweird.f32 %v882
    %vm946 = vweird.f32 %v940
    %vm947 = vmor %vm945, %vm946
    %v948 = vsel %vm947, %v940, %v944
    %v949 = vand.u32 2147483647, %v882
    %vm950 = vcmp.eq.f32.partialorder %v949, 8.507059e+37
    %v951 = vand.u32 %v882, 2147483648
    %v952 = vor.u32 1.1754944e-38, %v951
    %v953 = vsel %vm950, %v952, %v948
    %v954 = vmul.f32 1.0, %v953
    %v955 = vrcp.pop %v883
    %v956 = vmul.f32 %v883, %v955
    %v957 = vsub.f32 1.0, %v956
    %v958 = vmul.f32 %v955, %v957
    %v959 = vadd.f32 %v955, %v958
    %vm960 = vweird.f32 %v883
    %vm961 = vweird.f32 %v955
    %vm962 = vmor %vm960, %vm961
    %v963 = vsel %vm962, %v955, %v959
    %v964 = vand.u32 2147483647, %v883
    %vm965 = vcmp.eq.f32.partialorder %v964, 8.507059e+37
    %v966 = vand.u32 %v883, 2147483648
    %v967 = vor.u32 1.1754944e-38, %v966
    %v968 = vsel %vm965, %v967, %v963
    %v969 = vmul.f32 1.0, %v968
    %v970 = vrcp.pop %v884
    %v971 = vmul.f32 %v884, %v970
    %v972 = vsub.f32 1.0, %v971
    %v973 = vmul.f32 %v970, %v972
    %v974 = vadd.f32 %v970, %v973
    %vm975 = vweird.f32 %v884
    %vm976 = vweird.f32 %v970
    %vm977 = vmor %vm975, %vm976
    %v978 = vsel %vm977, %v970, %v974
    %v979 = vand.u32 2147483647, %v884
    %vm980 = vcmp.eq.f32.partialorder %v979, 8.507059e+37
    %v981 = vand.u32 %v884, 2147483648
    %v982 = vor.u32 1.1754944e-38, %v981
    %v983 = vsel %vm980, %v982, %v978
    %v984 = vmul.f32 1.0, %v983
    %v985 = vrcp.pop %v885
    %v986 = vmul.f32 %v885, %v985
    %v987 = vsub.f32 1.0, %v986
    %v988 = vmul.f32 %v985, %v987
    %v989 = vadd.f32 %v985, %v988
    %vm990 = vweird.f32 %v885
    %vm991 = vweird.f32 %v985
    %vm992 = vmor %vm990, %vm991
    %v993 = vsel %vm992, %v985, %v989
    %v994 = vand.u32 2147483647, %v885
    %vm995 = vcmp.eq.f32.partialorder %v994, 8.507059e+37
    %v996 = vand.u32 %v885, 2147483648
    %v997 = vor.u32 1.1754944e-38, %v996
    %v998 = vsel %vm995, %v997, %v993
    %v999 = vmul.f32 1.0, %v998
    %v1000 = vrcp.pop %v886
    %v1001 = vmul.f32 %v886, %v1000
    %v1002 = vsub.f32 1.0, %v1001
    %v1003 = vmul.f32 %v1000, %v1002
    %v1004 = vadd.f32 %v1000, %v1003
    %vm1005 = vweird.f32 %v886
    %vm1006 = vweird.f32 %v1000
    %vm1007 = vmor %vm1005, %vm1006
    %v1008 = vsel %vm1007, %v1000, %v1004
    %v1009 = vand.u32 2147483647, %v886
    %vm1010 = vcmp.eq.f32.partialorder %v1009, 8.507059e+37
    %v1011 = vand.u32 %v886, 2147483648
    %v1012 = vor.u32 1.1754944e-38, %v1011
    %v1013 = vsel %vm1010, %v1012, %v1008
    %v1014 = vmul.f32 1.0, %v1013
    %v1015 = vrcp.pop %v887
    %v1016 = vmul.f32 %v887, %v1015
    %v1017 = vsub.f32 1.0, %v1016
    %v1018 = vmul.f32 %v1015, %v1017
    %v1019 = vadd.f32 %v1015, %v1018
    %vm1020 = vweird.f32 %v887
    %vm1021 = vweird.f32 %v1015
    %vm1022 = vmor %vm1020, %vm1021
    %v1023 = vsel %vm1022, %v1015, %v1019
    %v1024 = vand.u32 2147483647, %v887
    %vm1025 = vcmp.eq.f32.partialorder %v1024, 8.507059e+37
    %v1026 = vand.u32 %v887, 2147483648
    %v1027 = vor.u32 1.1754944e-38, %v1026
    %v1028 = vsel %vm1025, %v1027, %v1023
    %v1029 = vmul.f32 1.0, %v1028
    %v1030 = vrcp.pop %v888
    %v1031 = vmul.f32 %v888, %v1030
    %v1032 = vsub.f32 1.0, %v1031
    %v1033 = vmul.f32 %v1030, %v1032
    %v1034 = vadd.f32 %v1030, %v1033
    %vm1035 = vweird.f32 %v888
    %vm1036 = vweird.f32 %v1030
    %vm1037 = vmor %vm1035, %vm1036
    %v1038 = vsel %vm1037, %v1030, %v1034
    %v1039 = vand.u32 2147483647, %v888
    %vm1040 = vcmp.eq.f32.partialorder %v1039, 8.507059e+37
    %v1041 = vand.u32 %v888, 2147483648
    %v1042 = vor.u32 1.1754944e-38, %v1041
    %v1043 = vsel %vm1040, %v1042, %v1038
    %v1044 = vmul.f32 1.0, %v1043
    %v1045 = vrcp.pop %v889
    %v1046 = vmul.f32 %v889, %v1045
    %v1047 = vsub.f32 1.0, %v1046
    %v1048 = vmul.f32 %v1045, %v1047
    %v1049 = vadd.f32 %v1045, %v1048
    %vm1050 = vweird.f32 %v889
    %vm1051 = vweird.f32 %v1045
    %vm1052 = vmor %vm1050, %vm1051
    %v1053 = vsel %vm1052, %v1045, %v1049
    %v1054 = vand.u32 2147483647, %v889
    %vm1055 = vcmp.eq.f32.partialorder %v1054, 8.507059e+37
    %v1056 = vand.u32 %v889, 2147483648
    %v1057 = vor.u32 1.1754944e-38, %v1056
    %v1058 = vsel %vm1055, %v1057, %v1053
    %v1059 = vmul.f32 1.0, %v1058
    %v1060 = vrcp.pop %v890
    %v1061 = vmul.f32 %v890, %v1060
    %v1062 = vsub.f32 1.0, %v1061
    %v1063 = vmul.f32 %v1060, %v1062
    %v1064 = vadd.f32 %v1060, %v1063
    %vm1065 = vweird.f32 %v890
    %vm1066 = vweird.f32 %v1060
    %vm1067 = vmor %vm1065, %vm1066
    %v1068 = vsel %vm1067, %v1060, %v1064
    %v1069 = vand.u32 2147483647, %v890
    %vm1070 = vcmp.eq.f32.partialorder %v1069, 8.507059e+37
    %v1071 = vand.u32 %v890, 2147483648
    %v1072 = vor.u32 1.1754944e-38, %v1071
    %v1073 = vsel %vm1070, %v1072, %v1068
    %v1074 = vmul.f32 1.0, %v1073
    %v1075 = vrcp.pop %v891
    %v1076 = vmul.f32 %v891, %v1075
    %v1077 = vsub.f32 1.0, %v1076
    %v1078 = vmul.f32 %v1075, %v1077
    %v1079 = vadd.f32 %v1075, %v1078
    %vm1080 = vweird.f32 %v891
    %vm1081 = vweird.f32 %v1075
    %vm1082 = vmor %vm1080, %vm1081
    %v1083 = vsel %vm1082, %v1075, %v1079
    %v1084 = vand.u32 2147483647, %v891
    %vm1085 = vcmp.eq.f32.partialorder %v1084, 8.507059e+37
    %v1086 = vand.u32 %v891, 2147483648
    %v1087 = vor.u32 1.1754944e-38, %v1086
    %v1088 = vsel %vm1085, %v1087, %v1083
    %v1089 = vmul.f32 1.0, %v1088
    %v1090 = vrcp.pop %v892
    %v1091 = vmul.f32 %v892, %v1090
    %v1092 = vsub.f32 1.0, %v1091
    %v1093 = vmul.f32 %v1090, %v1092
    %v1094 = vadd.f32 %v1090, %v1093
    %vm1095 = vweird.f32 %v892
    %vm1096 = vweird.f32 %v1090
    %vm1097 = vmor %vm1095, %vm1096
    %v1098 = vsel %vm1097, %v1090, %v1094
    %v1099 = vand.u32 2147483647, %v892
    %vm1100 = vcmp.eq.f32.partialorder %v1099, 8.507059e+37
    %v1101 = vand.u32 %v892, 2147483648
    %v1102 = vor.u32 1.1754944e-38, %v1101
    %v1103 = vsel %vm1100, %v1102, %v1098
    %v1104 = vmul.f32 1.0, %v1103
    %v1105 = vrcp.pop %v893
    %v1106 = vmul.f32 %v893, %v1105
    %v1107 = vsub.f32 1.0, %v1106
    %v1108 = vmul.f32 %v1105, %v1107
    %v1109 = vadd.f32 %v1105, %v1108
    %vm1110 = vweird.f32 %v893
    %vm1111 = vweird.f32 %v1105
    %vm1112 = vmor %vm1110, %vm1111
    %v1113 = vsel %vm1112, %v1105, %v1109
    %v1114 = vand.u32 2147483647, %v893
    %vm1115 = vcmp.eq.f32.partialorder %v1114, 8.507059e+37
    %v1116 = vand.u32 %v893, 2147483648
    %v1117 = vor.u32 1.1754944e-38, %v1116
    %v1118 = vsel %vm1115, %v1117, %v1113
    %v1119 = vmul.f32 1.0, %v1118
    %v1120 = vrcp.pop %v894
    %v1121 = vmul.f32 %v894, %v1120
    %v1122 = vsub.f32 1.0, %v1121
    %v1123 = vmul.f32 %v1120, %v1122
    %v1124 = vadd.f32 %v1120, %v1123
    %vm1125 = vweird.f32 %v894
    %vm1126 = vweird.f32 %v1120
    %vm1127 = vmor %vm1125, %vm1126
    %v1128 = vsel %vm1127, %v1120, %v1124
    %v1129 = vand.u32 2147483647, %v894
    %vm1130 = vcmp.eq.f32.partialorder %v1129, 8.507059e+37
    %v1131 = vand.u32 %v894, 2147483648
    %v1132 = vor.u32 1.1754944e-38, %v1131
    %v1133 = vsel %vm1130, %v1132, %v1128
    %v1134 = vmul.f32 1.0, %v1133
    %v1135 = vld [vmem:[%s5] sm:$0xff]
    %v1136 = vld [vmem:[%s6] sm:$0xff]
    %1138 = vset.pattern.permute.xlu0 0
    %1139 = vperm.xlu0 %1138, %v1136
    %v1140 = vpop.permute.xlu0 %1139
    %1142 = vmatpush.msra.mxu0 %v1134
    %1143 = vmatpush.msra.mxu0 %v1119
    %1144 = vmatpush.msra.mxu0 %v1104
    %1145 = vmatpush.msra.mxu0 %v1089
    %1146 = vmatpush.msra.mxu0 %v1074
    %1147 = vmatpush.msra.mxu0 %v1059
    %1148 = vmatpush.msra.mxu0 %v1044
    %1149 = vmatpush.msra.mxu0 %v1029
    %1150 = vmatpush.msra.mxu0 %v1014
    %1151 = vmatpush.msra.mxu0 %v999
    %1152 = vmatpush.msra.mxu0 %v984
    %1153 = vmatpush.msra.mxu0 %v969
    %1154 = vmatpush.msra.mxu0 %v954
    %1155 = vmatpush.msra.mxu0 %v939
    %1156 = vmatpush.msra.mxu0 %v924
    %1157 = vmatpush.msra.mxu0 %v909
    %1158 = vmatmul.f32.gmra.mxu0 %v1135
    %v1159 = vpop.f32.mrf.mxu0
    %v1160 = vadd.f32 %v1140, %v1159
    %1161 = vdwg.mxu0
    %1162 = vst [vmem:[#allocation2] sm:$0xff] %v1160
    // Predicated region
    $region30: #{tpu_custom_call.1} parent=1 // pred_check
      _
    $region31: #{tpu_custom_call.1} parent=1 // pred_check_branch
      %1164 = sbr.rel (0) target = $region33
    $region32: #{tpu_custom_call.1} parent=1 // pred_region
      %1166 = vsyncadd [#allocation3], 0
      %s1168 = sshll.u32 [#allocation2], 4
      %s1169 = int_to_ptr.vmem [resolvable:$true] %s1168
      %s1170 = sshll.u32 %s7, 4
      %s1171 = int_to_ptr.hbm [resolvable:$true] %s1170
      %1173 = dma.vmem_to_hbm [thread:$0]  %s1169, 128, %s1171, [#allocation3]
    $region33: #{tpu_custom_call.1} parent=1 // pred_fallthru
      _
    // Predicated region
    $region34: #{tpu_custom_call.1} parent=1 // pred_check
      _
    $region35: #{tpu_custom_call.1} parent=1 // pred_check_branch
      %1175 = sbr.rel (0) target = $region37
    $region36: #{tpu_custom_call.1} parent=1 // pred_region
      %1177 = dma.done [#allocation3], 128
    $region37: #{tpu_custom_call.1} parent=1 // pred_fallthru
      _
    %1178 = vsyncpa [#allocation3], 1

</llo_original>
